<compile_context>
chip_gen: v7x
topology: tpu7x:2x2x1
jax: 0.10.0
libtpu: 0.0.40
codegen_flags: <defaults>
</compile_context>

<pallas_src>
import functools
import math

import jax
import jax.numpy as jnp
from jax.experimental import pallas as pl
from jax.experimental.pallas import tpu as pltpu


def _mse_kernel(xt_ref, xp_ref, seg_ref, o_ref, *, inv_d):
    # Cast to f32 before subtracting (better numerics for low-precision inputs).
    xt = xt_ref[...].astype(jnp.float32)
    xp = xp_ref[...].astype(jnp.float32)
    diff = xp - xt
    sq = diff * diff
    if seg_ref.shape[1] == 1:
        # Unpacked case (D >= 128): plain cross-lane reduction (XLU), hidden
        # under the HBM DMA time.
        sums = jnp.sum(sq, axis=-1, keepdims=True)
    else:
        # Packed case: segmented reduction over each length-D lane group via an
        # MXU matmul with the 0/1 segment-sum matrix, f32 accumulate.  Result
        # lands directly in the (tile_rows, P) output layout.
        sums = jnp.dot(sq, seg_ref[...], preferred_element_type=jnp.float32)
    o_ref[...] = (sums * inv_d).astype(o_ref.dtype)


def mse(x_true, x_pred, *, block_bytes=2 * 1024 * 1024):
    """Pallas TPU implementation of torch.mean((x_pred - x_true) ** 2, dim=-1)."""
    assert x_true.shape == x_pred.shape, (x_true.shape, x_pred.shape)
    assert x_true.ndim >= 1
    lead_shape = x_true.shape[:-1]
    D = x_true.shape[-1]
    R = int(math.prod(lead_shape))
    out_dtype = x_true.dtype
    dtype_bytes = jnp.dtype(x_true.dtype).itemsize

    # ---- packing: fill the 128-lane axis when D is small --------------------
    if D < 128:
        P = 128 // math.gcd(D, 128)  # rows packed per wide row; (P*D) % 128 == 0
    else:
        P = 1
    wide = P * D

    # ---- row tile sized by VMEM bytes (multiple of 8 sublanes) --------------
    rows_needed = -(-R // P)
    rows_ceil8 = -(-rows_needed // 8) * 8
    row_bytes = wide * dtype_bytes
    tile_rows = max(8, (block_bytes // row_bytes) // 8 * 8)
    tile_rows = min(tile_rows, rows_ceil8)
    # Prefer >= 2 grid steps (pipelining + both TensorCores on v7x) when there
    # is enough data to split.
    if tile_rows == rows_ceil8 and rows_ceil8 >= 16:
        tile_rows = max(8, (rows_ceil8 // 2) // 8 * 8)
    num_tiles = -(-rows_needed // tile_rows)
    rows_total = num_tiles * tile_rows
    grid = (num_tiles,)

    # ---- pad ragged R (never silently drop remainder rows), then pack -------
    xt2 = x_true.reshape(R, D)
    xp2 = x_pred.reshape(R, D)
    pad_rows = rows_total * P - R
    if pad_rows:
        xt2 = jnp.pad(xt2, ((0, pad_rows), (0, 0)))
        xp2 = jnp.pad(xp2, ((0, pad_rows), (0, 0)))
    xt2 = xt2.reshape(rows_total, wide)
    xp2 = xp2.reshape(rows_total, wide)

    # 0/1 segment-sum matrix: column p selects lanes [p*D, (p+1)*D).
    lane_group = jnp.arange(wide, dtype=jnp.int32) // D
    seg = (lane_group[:, None] == jnp.arange(P, dtype=jnp.int32)[None, :]).astype(
        jnp.float32
    )

    # ---- VMEM budget: 2 inputs x 2 pipeline buffers + f32 temps + output ----
    in_block = tile_rows * wide * dtype_bytes
    f32_block = tile_rows * wide * 4
    out_block = tile_rows * P * jnp.dtype(out_dtype).itemsize
    vmem_need = 4 * in_block + 4 * f32_block + 2 * out_block + wide * P * 4
    # Clamp: comfortably under v7x's 64 MiB physical VMEM, above the small
    # default scoped limits on v5e (~16 MiB) / v6e (~32 MiB).
    vmem_limit = int(min(max(vmem_need + (4 << 20), 32 << 20), 48 << 20))
    # TODO(synk): for extremely large D (~>=64K) add a lane-axis ("arbitrary")
    # reduction grid dimension with an f32 accumulator finalized under pl.when.

    kernel = functools.partial(_mse_kernel, inv_d=1.0 / float(D))
    out2 = pl.pallas_call(
        kernel,
        out_shape=jax.ShapeDtypeStruct((rows_total, P), out_dtype),
        grid=grid,
        in_specs=[
            pl.BlockSpec((tile_rows, wide), lambda i: (i, 0)),
            pl.BlockSpec((tile_rows, wide), lambda i: (i, 0)),
            pl.BlockSpec((wide, P), lambda i: (0, 0)),  # resident across steps
        ],
        out_specs=pl.BlockSpec((tile_rows, P), lambda i: (i, 0)),
        compiler_params=pltpu.CompilerParams(
            dimension_semantics=("parallel",),
            vmem_limit_bytes=vmem_limit,
        ),
    )(xt2, xp2, seg)

    # Unpack: packed row q, slot p  ->  original row q*P + p (row-major), then
    # drop padding and restore leading dims.
    return out2.reshape(rows_total * P)[:R].reshape(lead_shape)


if __name__ == "__main__":
    key = jax.random.PRNGKey(0)
    k1, k2 = jax.random.split(key)

    # Primary CVAE-like reconstruction shape (small-D packed path, grid of 2).
    x_true = jax.random.normal(k1, (2, 4, 16, 16), dtype=jnp.float32)
    x_pred = jax.random.normal(k2, (2, 4, 16, 16), dtype=jnp.float32)
    out = jax.block_until_ready(mse(x_true, x_pred))
    ref = jnp.mean((x_pred - x_true) ** 2, axis=-1)
    assert out.shape == ref.shape == (2, 4, 16)
    assert jnp.allclose(out, ref, atol=1e-6, rtol=1e-5), float(
        jnp.max(jnp.abs(out - ref))
    )

    # Ragged leading dims + D that does not divide 128 (padding path).
    k3, k4 = jax.random.split(k2)
    a = jax.random.normal(k3, (3, 5, 7, 24), dtype=jnp.float32)
    b = jax.random.normal(k4, (3, 5, 7, 24), dtype=jnp.float32)
    out2 = jax.block_until_ready(mse(a, b))
    ref2 = jnp.mean((b - a) ** 2, axis=-1)
    assert out2.shape == ref2.shape == (3, 5, 7)
    assert jnp.allclose(out2, ref2, atol=1e-6, rtol=1e-5)

    # Large-D (unpacked, cross-lane reduction) path.
    k5, k6 = jax.random.split(k4)
    c = jax.random.normal(k5, (2, 8, 256), dtype=jnp.float32)
    d = jax.random.normal(k6, (2, 8, 256), dtype=jnp.float32)
    out3 = jax.block_until_ready(mse(c, d))
    ref3 = jnp.mean((d - c) ** 2, axis=-1)
    assert out3.shape == ref3.shape == (2, 8)
    assert jnp.allclose(out3, ref3, atol=1e-6, rtol=1e-5)

    print("KERNEL_OK")
</pallas_src>

<mosaic_0001>
module attributes {stable_mosaic.version = 11 : i64} {
  func.func @_mse_kernel(%arg0: i32, %arg1: memref<8x128xf32, #tpu.memory_space<vmem>>, %arg2: memref<8x128xf32, #tpu.memory_space<vmem>>, %arg3: memref<128x8xf32, #tpu.memory_space<vmem>>, %arg4: memref<8x8xf32, #tpu.memory_space<vmem>>) attributes {dimension_semantics = [#tpu.dimension_semantics<parallel>], iteration_bounds = array<i64: 2>, scalar_prefetch = 0 : i64, scratch_operands = 0 : i64, tpu.core_type = #tpu.core_type<tc>, window_params = [{transform_indices = @transform_0, window_bounds = array<i64: 8, 128>}, {transform_indices = @transform_1, window_bounds = array<i64: 8, 128>}, {pipeline_mode = #tpu.pipeline_mode<synchronous>, transform_indices = @transform_2, window_bounds = array<i64: 128, 8>}, {transform_indices = @transform_3, window_bounds = array<i64: 8, 8>}]} {
    %c0 = arith.constant 0 : index
    %c0_0 = arith.constant 0 : index
    %0 = vector.load %arg1[%c0, %c0_0] : memref<8x128xf32, #tpu.memory_space<vmem>>, vector<8x128xf32>
    %c0_1 = arith.constant 0 : index
    %c0_2 = arith.constant 0 : index
    %1 = vector.load %arg2[%c0_1, %c0_2] : memref<8x128xf32, #tpu.memory_space<vmem>>, vector<8x128xf32>
    %2 = arith.subf %1, %0 : vector<8x128xf32>
    %3 = arith.mulf %2, %2 : vector<8x128xf32>
    %c0_3 = arith.constant 0 : index
    %c0_4 = arith.constant 0 : index
    %4 = vector.load %arg3[%c0_3, %c0_4] : memref<128x8xf32, #tpu.memory_space<vmem>>, vector<128x8xf32>
    %cst = arith.constant dense<0.000000e+00> : vector<8x8xf32>
    %5 = tpu.matmul %3, %4, %cst {dimension_numbers = #tpu.dot_dimension_numbers<[1], [0], [0], [1], [0, 0, 1, 1], [], []>} : vector<8x128xf32>, vector<128x8xf32>, vector<8x8xf32> -> vector<8x8xf32>
    %cst_5 = arith.constant 6.250000e-02 : f32
    %6 = vector.broadcast %cst_5 : f32 to vector<8x8xf32>
    %7 = arith.mulf %5, %6 : vector<8x8xf32>
    %c0_6 = arith.constant 0 : index
    %c0_7 = arith.constant 0 : index
    %8 = vector.load %arg4[%c0_6, %c0_7] : memref<8x8xf32, #tpu.memory_space<vmem>>, vector<8x8xf32>
    tpu.vector_store %arg4[%c0_6, %c0_7], %7 {strides = array<i32>} : memref<8x8xf32, #tpu.memory_space<vmem>>, vector<8x8xf32>,
    return
  }
  func.func @transform_0(%arg0: i32) -> (i32, i32) {
    %c0_i32 = arith.constant 0 : i32
    %c0_i32_0 = arith.constant 0 : i32
    return %arg0, %c0_i32 : i32, i32
  }
  func.func @transform_1(%arg0: i32) -> (i32, i32) {
    %c0_i32 = arith.constant 0 : i32
    %c0_i32_0 = arith.constant 0 : i32
    return %arg0, %c0_i32 : i32, i32
  }
  func.func @transform_2(%arg0: i32) -> (i32, i32) {
    %c0_i32 = arith.constant 0 : i32
    %c0_i32_0 = arith.constant 0 : i32
    %c0_i32_1 = arith.constant 0 : i32
    return %c0_i32, %c0_i32_0 : i32, i32
  }
  func.func @transform_3(%arg0: i32) -> (i32, i32) {
    %c0_i32 = arith.constant 0 : i32
    %c0_i32_0 = arith.constant 0 : i32
    return %arg0, %c0_i32 : i32, i32
  }
}

</mosaic_0001>

<llo_original>
// kernel: tpu_custom_call.1
$region0: #{tpu_custom_call.1}
  #allocation0 [shape = 'u32[]', space=smem, size = 0x4, offset = 0x4, fixed_abs, tag = 'smem constant byte address 0x4 - core index']
  #allocation1 [shape = 'u32[144,128]{1,0:T(1,128)}', space=vmem, size = 0x12000, scoped, tag = 'internal scratch']
  %s0 = inlined_call_operand.vmem [shape: f32[16,128], index: 0, kind: input, shape index: {}]
  %s1 = inlined_call_operand.vmem [shape: f32[16,128], index: 1, kind: input, shape index: {}]
  %s2 = inlined_call_operand.vmem [shape: f32[128,8], index: 2, kind: input, shape index: {}]
  %s3 = inlined_call_operand.vmem [shape: f32[16,8], index: 3, kind: output, shape index: {}]
  %s4 = sld [smem:[#allocation0]]
  $region45: #{tpu_custom_call.1} parent=0
    _
  %s6 = ssub.s32 1, %s4
  %s7 = scalar_select 0, %s6, %s4
  loop: start=0, step=1, limit=4
  $region2: #{tpu_custom_call.1} parent=0 // loop_pre_header
    _
  $region3: #{tpu_custom_call.1} parent=0 // loop_header
    %s9 = sphi 0, %s13
    %p10 = scmp.ge.s32.totalorder %s9, 4
    %s19 = sphi 0, %s21
    %s22 = sphi 0, %s19
    %s23 = sphi 0, %s22
    %s39 = sphi 0, %s23
    %s45 = sphi 0, %s47
    %s48 = sphi 0, %s45
    %s49 = sphi 0, %s48
    %s65 = sphi 0, %s49
    %s69 = sphi 0, %s69
    %s71 = sphi 0, %s69
    %s72 = sphi 0, %s71
    %s86 = sphi 0, %s72
    %s92 = sphi 0, %s94
    %s95 = sphi 0, %s92
    %s96 = sphi 0, %s95
    %s112 = sphi 0, %s96
  $region4: #{tpu_custom_call.1} parent=0 // loop_header_branch
    %12 = sbr.rel (%p10) target = $region8
  $region5: #{tpu_custom_call.1} parent=0 // loop_body
    %s14 = ssub.s32 %s9, 1
    %s15 = ssub.s32 %s9, 2
    %s16 = sadd.s32 %s9, 1
    %s17 = ssub.s32 %s9, %s16
    %p18 = scmp.eq.s32.totalorder %s17, 0
    %s20 = sadd.s32 %s19, 1
    %s21 = scalar_select %p18, %s19, %s20
    %p24 = pneg %p18
    %p25 = scmp.eq.s32.totalorder %s9, 1
    %p26 = por %p24, %p25
    %p27 = scmp.ne.s32.totalorder %s19, %s22
    %p28 = scmp.eq.s32.totalorder %s9, 0
    %p29 = por %p27, %p28
    %p30 = scmp.ne.s32.totalorder %s19, %s22
    %p31 = scmp.eq.s32.totalorder %s14, 1
    %p32 = por %p30, %p31
    %p33 = scmp.ne.s32.totalorder %s22, %s23
    %p34 = scmp.eq.s32.totalorder %s14, 0
    %p35 = por %p33, %p34
    %p36 = scmp.ne.s32.totalorder %s22, %s23
    %p37 = scmp.eq.s32.totalorder %s15, 1
    %p38 = por %p36, %p37
    %p40 = scmp.ne.s32.totalorder %s23, %s39
    %p41 = scmp.eq.s32.totalorder %s15, 0
    %p42 = por %p40, %p41
    %s43 = ssub.s32 %s9, %s16
    %p44 = scmp.eq.s32.totalorder %s43, 0
    %s46 = sadd.s32 %s45, 1
    %s47 = scalar_select %p44, %s45, %s46
    %p50 = pneg %p44
    %p51 = scmp.eq.s32.totalorder %s9, 1
    %p52 = por %p50, %p51
    %p53 = scmp.ne.s32.totalorder %s45, %s48
    %p54 = scmp.eq.s32.totalorder %s9, 0
    %p55 = por %p53, %p54
    %p56 = scmp.ne.s32.totalorder %s45, %s48
    %p57 = scmp.eq.s32.totalorder %s14, 1
    %p58 = por %p56, %p57
    %p59 = scmp.ne.s32.totalorder %s48, %s49
    %p60 = scmp.eq.s32.totalorder %s14, 0
    %p61 = por %p59, %p60
    %p62 = scmp.ne.s32.totalorder %s48, %s49
    %p63 = scmp.eq.s32.totalorder %s15, 1
    %p64 = por %p62, %p63
    %p66 = scmp.ne.s32.totalorder %s49, %s65
    %p67 = scmp.eq.s32.totalorder %s15, 0
    %p68 = por %p66, %p67
    %s70 = sadd.s32 %s69, 1
    %p73 = scmp.eq.s32.totalorder %s9, 1
    %p74 = scmp.ne.s32.totalorder %s69, %s71
    %p75 = scmp.eq.s32.totalorder %s9, 0
    %p76 = por %p74, %p75
    %p77 = scmp.ne.s32.totalorder %s69, %s71
    %p78 = scmp.eq.s32.totalorder %s14, 1
    %p79 = por %p77, %p78
    %p80 = scmp.ne.s32.totalorder %s71, %s72
    %p81 = scmp.eq.s32.totalorder %s14, 0
    %p82 = por %p80, %p81
    %p83 = scmp.ne.s32.totalorder %s71, %s72
    %p84 = scmp.eq.s32.totalorder %s15, 1
    %p85 = por %p83, %p84
    %p87 = scmp.ne.s32.totalorder %s72, %s86
    %p88 = scmp.eq.s32.totalorder %s15, 0
    %p89 = por %p87, %p88
    %s90 = ssub.s32 %s9, %s16
    %p91 = scmp.eq.s32.totalorder %s90, 0
    %s93 = sadd.s32 %s92, 1
    %s94 = scalar_select %p91, %s92, %s93
    %p97 = pneg %p91
    %p98 = scmp.eq.s32.totalorder %s9, 1
    %p99 = por %p97, %p98
    %p100 = scmp.ne.s32.totalorder %s92, %s95
    %p101 = scmp.eq.s32.totalorder %s9, 0
    %p102 = por %p100, %p101
    %p103 = scmp.ne.s32.totalorder %s92, %s95
    %p104 = scmp.eq.s32.totalorder %s14, 1
    %p105 = por %p103, %p104
    %p106 = scmp.ne.s32.totalorder %s95, %s96
    %p107 = scmp.eq.s32.totalorder %s14, 0
    %p108 = por %p106, %p107
    %p109 = scmp.ne.s32.totalorder %s95, %s96
    %p110 = scmp.eq.s32.totalorder %s15, 1
    %p111 = por %p109, %p110
    %p113 = scmp.ne.s32.totalorder %s96, %s112
    %p114 = scmp.eq.s32.totalorder %s15, 0
    %p115 = por %p113, %p114
    %p116 = scmp.le.s32.totalorder 1, %s9
    %p117 = scmp.lt.s32.totalorder %s9, 3
    %p118 = pnand %p116, %p117
    %p119 = pneg %p118
    // Predicated region
    $region9: #{tpu_custom_call.1} parent=5 // pred_check
      _
    $region10: #{tpu_custom_call.1} parent=5 // pred_check_branch
      %121 = sbr.rel (%p118) target = $region12
    $region11: #{tpu_custom_call.1} parent=5 // pred_region
      %s122 = ssub.s32 %s9, 1
      // Predicated region
      $region13: #{tpu_custom_call.1} parent=11 // pred_check
        %p123 = pneg %p82
      $region14: #{tpu_custom_call.1} parent=11 // pred_check_branch
        %125 = sbr.rel (%p123) target = $region16
      $region15: #{tpu_custom_call.1} parent=11 // pred_region
        _
      $region16: #{tpu_custom_call.1} parent=11 // pred_fallthru
        _
    $region12: #{tpu_custom_call.1} parent=5 // pred_fallthru
      _
    %p126 = scmp.lt.s32.totalorder %s9, 2
    // Predicated region
    $region17: #{tpu_custom_call.1} parent=5 // pred_check
      %p127 = pneg %p126
    $region18: #{tpu_custom_call.1} parent=5 // pred_check_branch
      %129 = sbr.rel (%p127) target = $region20
    $region19: #{tpu_custom_call.1} parent=5 // pred_region
      // Predicated region
      $region21: #{tpu_custom_call.1} parent=19 // pred_check
        %p130 = pneg %p29
      $region22: #{tpu_custom_call.1} parent=19 // pred_check_branch
        %132 = sbr.rel (%p130) target = $region24
      $region23: #{tpu_custom_call.1} parent=19 // pred_region
        %p133 = scmp.lt.s32.totalorder %s9, 1
        %s134 = scalar_select %p133, %s9, 1
        %s135 = smul.addr %s134, 8
        %s136 = scalar_lea.vmem %s0, %s135
      $region24: #{tpu_custom_call.1} parent=19 // pred_fallthru
        _
      // Predicated region
      $region25: #{tpu_custom_call.1} parent=19 // pred_check
        %p137 = pneg %p55
      $region26: #{tpu_custom_call.1} parent=19 // pred_check_branch
        %139 = sbr.rel (%p137) target = $region28
      $region27: #{tpu_custom_call.1} parent=19 // pred_region
        %p140 = scmp.lt.s32.totalorder %s9, 1
        %s141 = scalar_select %p140, %s9, 1
        %s142 = smul.addr %s141, 8
        %s143 = scalar_lea.vmem %s1, %s142
      $region28: #{tpu_custom_call.1} parent=19 // pred_fallthru
        _
    $region20: #{tpu_custom_call.1} parent=5 // pred_fallthru
      _
    %p144 = scmp.le.s32.totalorder 1, %s9
    %p145 = scmp.lt.s32.totalorder %s9, 3
    %p146 = pnand %p144, %p145
    %p147 = pneg %p146
    // Predicated region
    $region29: #{tpu_custom_call.1} parent=5 // pred_check
      _
    $region30: #{tpu_custom_call.1} parent=5 // pred_check_branch
      %149 = sbr.rel (%p146) target = $region32
    $region31: #{tpu_custom_call.1} parent=5 // pred_region
      %s150 = ssub.s32 %s9, 1
      %p151 = scmp.lt.s32.totalorder %s14, 1
      %s152 = scalar_select %p151, %s14, 1
      %s153 = smul.addr %s152, 8
      %s154 = scalar_lea.vmem %s0, %s153
      %p155 = pneg %p35
      %p156 = pneg %p32
      %p157 = scmp.lt.s32.totalorder %s14, 1
      %s158 = scalar_select %p157, %s14, 1
      %s159 = smul.addr %s158, 8
      %s160 = scalar_lea.vmem %s1, %s159
      %p161 = pneg %p61
      %p162 = pneg %p58
      %p163 = pneg %p82
      %p164 = pneg %p79
      %p165 = pneg %p108
      %p166 = pneg %p105
      %p167 = scmp.lt.s32.totalorder %s14, 1
      %s168 = scalar_select %p167, %s14, 1
      %s169 = smul.addr %s168, 8
      %s170 = scalar_lea.vmem %s3, %s169
      %p171 = scmp.lt.s32.totalorder %s14, 1
      %s172 = scalar_select %p171, %s14, 1
      %s173 = smul.addr %s172, 8
      %s174 = scalar_lea.vmem %s0, %s173
      %p175 = scmp.lt.s32.totalorder %s14, 1
      %s176 = scalar_select %p175, %s14, 1
      %s177 = smul.addr %s176, 8
      %s178 = scalar_lea.vmem %s1, %s177
      %p179 = scmp.lt.s32.totalorder %s14, 1
      %s180 = scalar_select %p179, %s14, 1
      %s181 = smul.addr %s180, 8
      %s182 = scalar_lea.vmem %s3, %s181
      %v183 = vld [vmem:[%s174] sm:$0xff]
      %v184 = vld [vmem:[%s178] sm:$0xff]
      %v185 = vsub.f32 %v184, %v183
      %v186 = vmul.f32 %v185, %v185
      %v187 = vld [vmem:[%s2] sm:$0xff]
      %v188 = vld [vmem:[%s2 + $0x8] sm:$0xff]
      %v189 = vld [vmem:[%s2 + $0x10] sm:$0xff]
      %v190 = vld [vmem:[%s2 + $0x18] sm:$0xff]
      %v191 = vld [vmem:[%s2 + $0x20] sm:$0xff]
      %v192 = vld [vmem:[%s2 + $0x28] sm:$0xff]
      %v193 = vld [vmem:[%s2 + $0x30] sm:$0xff]
      %v194 = vld [vmem:[%s2 + $0x38] sm:$0xff]
      %v195 = vld [vmem:[%s2 + $0x40] sm:$0xff]
      %v196 = vld [vmem:[%s2 + $0x48] sm:$0xff]
      %v197 = vld [vmem:[%s2 + $0x50] sm:$0xff]
      %v198 = vld [vmem:[%s2 + $0x58] sm:$0xff]
      %v199 = vld [vmem:[%s2 + $0x60] sm:$0xff]
      %v200 = vld [vmem:[%s2 + $0x68] sm:$0xff]
      %v201 = vld [vmem:[%s2 + $0x70] sm:$0xff]
      %v202 = vld [vmem:[%s2 + $0x78] sm:$0xff]
      %203 = vmatprep.subr.mxu0 0.0
      %204 = vmatpush1.msra.mxu0 %v187
      %205 = vmatprep.subr.mxu0 0.0
      %206 = vmatpush1.msra.mxu0 %v188
      %207 = vmatprep.subr.mxu0 0.0
      %208 = vmatpush1.msra.mxu0 %v189
      %209 = vmatprep.subr.mxu0 0.0
      %210 = vmatpush1.msra.mxu0 %v190
      %211 = vmatprep.subr.mxu0 0.0
      %212 = vmatpush1.msra.mxu0 %v191
      %213 = vmatprep.subr.mxu0 0.0
      %214 = vmatpush1.msra.mxu0 %v192
      %215 = vmatprep.subr.mxu0 0.0
      %216 = vmatpush1.msra.mxu0 %v193
      %217 = vmatprep.subr.mxu0 0.0
      %218 = vmatpush1.msra.mxu0 %v194
      %219 = vmatprep.subr.mxu0 0.0
      %220 = vmatpush1.msra.mxu0 %v195
      %221 = vmatprep.subr.mxu0 0.0
      %222 = vmatpush1.msra.mxu0 %v196
      %223 = vmatprep.subr.mxu0 0.0
      %224 = vmatpush1.msra.mxu0 %v197
      %225 = vmatprep.subr.mxu0 0.0
      %226 = vmatpush1.msra.mxu0 %v198
      %227 = vmatprep.subr.mxu0 0.0
      %228 = vmatpush1.msra.mxu0 %v199
      %229 = vmatprep.subr.mxu0 0.0
      %230 = vmatpush1.msra.mxu0 %v200
      %231 = vmatprep.subr.mxu0 0.0
      %232 = vmatpush1.msra.mxu0 %v201
      %233 = vmatprep.subr.mxu0 0.0
      %234 = vmatpush1.msra.mxu0 %v202
      %235 = vmatprep.subr.mxu0 0.0
      %236 = vmatpush1.msra.mxu0 0.0
      %237 = vmatprep.subr.mxu0 0.0
      %238 = vmatpush1.msra.mxu0 0.0
      %239 = vmatprep.subr.mxu0 0.0
      %240 = vmatpush1.msra.mxu0 0.0
      %241 = vmatprep.subr.mxu0 0.0
      %242 = vmatpush1.msra.mxu0 0.0
      %243 = vmatprep.subr.mxu0 0.0
      %244 = vmatpush1.msra.mxu0 0.0
      %245 = vmatprep.subr.mxu0 0.0
      %246 = vmatpush1.msra.mxu0 0.0
      %247 = vmatprep.subr.mxu0 0.0
      %248 = vmatpush1.msra.mxu0 0.0
      %249 = vmatprep.subr.mxu0 0.0
      %250 = vmatpush1.msra.mxu0 0.0
      %251 = vmatprep.subr.mxu0 0.0
      %252 = vmatpush1.msra.mxu0 0.0
      %253 = vmatprep.subr.mxu0 0.0
      %254 = vmatpush1.msra.mxu0 0.0
      %255 = vmatprep.subr.mxu0 0.0
      %256 = vmatpush1.msra.mxu0 0.0
      %257 = vmatprep.subr.mxu0 0.0
      %258 = vmatpush1.msra.mxu0 0.0
      %259 = vmatprep.subr.mxu0 0.0
      %260 = vmatpush1.msra.mxu0 0.0
      %261 = vmatprep.subr.mxu0 0.0
      %262 = vmatpush1.msra.mxu0 0.0
      %263 = vmatprep.subr.mxu0 0.0
      %264 = vmatpush1.msra.mxu0 0.0
      %265 = vmatprep.subr.mxu0 0.0
      %266 = vmatpush1.msra.mxu0 0.0
      %267 = vmatprep.mubr.f32.mxu0 0.0
      %268 = vmatmul.mubr.f32.gmra.mrb[0].mxu0 %v186
      %v269 = vpop.f32.mrb[0].mxu0
      %v270 = vadd.f32 0.0, %v269
      %v271 = vpop.f32.mrb[0].mxu0
      %272 = vdwg.mxu0
      %v273 = vmul.f32 %v270, 0.0625
      %vm274 = vcmask 64512
      %275 = vst.msk [vmem:[%s182] sm:$0xff] %vm274, %v273
      %p276 = scmp.lt.s32.totalorder %s14, 1
      %s277 = scalar_select %p276, %s14, 1
      %s278 = smul.addr %s277, 8
      %s279 = scalar_lea.vmem %s3, %s278
      // Predicated region
      $region33: #{tpu_custom_call.1} parent=31 // pred_check
        %p280 = pneg %p105
      $region34: #{tpu_custom_call.1} parent=31 // pred_check_branch
        %282 = sbr.rel (%p280) target = $region36
      $region35: #{tpu_custom_call.1} parent=31 // pred_region
        _
      $region36: #{tpu_custom_call.1} parent=31 // pred_fallthru
        _
    $region32: #{tpu_custom_call.1} parent=5 // pred_fallthru
      _
    %p283 = scmp.le.s32.totalorder 2, %s9
    // Predicated region
    $region37: #{tpu_custom_call.1} parent=5 // pred_check
      %p284 = pneg %p283
    $region38: #{tpu_custom_call.1} parent=5 // pred_check_branch
      %286 = sbr.rel (%p284) target = $region40
    $region39: #{tpu_custom_call.1} parent=5 // pred_region
      %s287 = ssub.s32 %s9, 2
      // Predicated region
      $region41: #{tpu_custom_call.1} parent=39 // pred_check
        %p288 = pneg %p111
      $region42: #{tpu_custom_call.1} parent=39 // pred_check_branch
        %290 = sbr.rel (%p288) target = $region44
      $region43: #{tpu_custom_call.1} parent=39 // pred_region
        %p291 = scmp.lt.s32.totalorder %s15, 1
        %s292 = scalar_select %p291, %s15, 1
        %s293 = smul.addr %s292, 8
        %s294 = scalar_lea.vmem %s3, %s293
      $region44: #{tpu_custom_call.1} parent=39 // pred_fallthru
        _
    $region40: #{tpu_custom_call.1} parent=5 // pred_fallthru
      _
  $region6: #{tpu_custom_call.1} parent=0 // loop_footer
    %s13 = sadd.s32 1, %s9
  $region7: #{tpu_custom_call.1} parent=0 // loop_footer_branch
    %8 = sbr.rel target = $region3
  $region8: #{tpu_custom_call.1} parent=0 // loop_exit
    _

</llo_original>
